<compile_context>
chip_gen: v7x
topology: tpu7x:2x2x1
jax: 0.10.0
libtpu: 0.0.40
codegen_flags: <defaults>
</compile_context>

<pallas_src>
import jax
import jax.numpy as jnp
from jax.experimental import pallas as pl
from jax.experimental.pallas import tpu as pltpu

_IMAGENET_STD = (0.229, 0.224, 0.225)
_IMAGENET_MEAN = (0.485, 0.456, 0.406)


def _preprocess_kernel(x_ref, o_ref):
    """One grid step = one image block (1, C, H, W).

    std/mean enter as Python-float immediates (no captured array constants).
    Pass 1 computes the per-image amax via the monotone identity
    max_hw(std_c*x + mean_c) = std_c*max_hw(x) + mean_c (std_c > 0), so the
    denormalized tensor is never materialized.  Pass 2 re-reads x (VMEM-only
    traffic) and stores the fused scale+offset result.
    """
    c_dim = x_ref.shape[1]

    # Pass 1: per-channel spatial max on the raw input, combined with scalar
    # math into the per-image amax of the denormalized tensor.
    ch_max = []
    for c in range(c_dim):
        ch_max.append(
            jnp.max(x_ref[0, c, :, :]) * _IMAGENET_STD[c] + _IMAGENET_MEAN[c]
        )
    img_max = ch_max[0]
    for c in range(1, c_dim):
        img_max = jnp.maximum(img_max, ch_max[c])

    # One scalar reciprocal per image; everything else is a vector mul+add.
    inv_max = 1.0 / img_max

    # Pass 2: out = (x*std + mean) / amax  ==  x*(std*inv) + (mean*inv).
    # Second read of x_ref only touches VMEM (no extra HBM traffic).
    for c in range(c_dim):
        scale = _IMAGENET_STD[c] * inv_max
        offset = _IMAGENET_MEAN[c] * inv_max
        o_ref[0, c, :, :] = (
            x_ref[0, c, :, :] * scale + offset
        ).astype(o_ref.dtype)


def preprocess(batch, out_dtype=None):
    """batch: (B, C, H, W) float NCHW.

    Returns the normalized batch PostModel.forward feeds into the YOLO model.
    Pass out_dtype=jnp.bfloat16 if the downstream detector runs in bf16 to
    halve the HBM write stream (kernel is bandwidth-bound on all generations).
    """
    B, C, H, W = batch.shape
    assert C == len(_IMAGENET_STD), "PostModel hardcodes 3-channel RGB stats"
    out_dtype = batch.dtype if out_dtype is None else out_dtype

    # Full-image blocks: last two block dims equal the array dims, so the
    # (8,128) constraint never triggers; at real 640x640 inputs W = 5*128
    # gives unmasked lane-dense stores (the 16x16 test shape merely falls
    # back to masked stores, which is correct).
    in_itemsize = jnp.dtype(batch.dtype).itemsize
    out_itemsize = jnp.dtype(out_dtype).itemsize
    cost = pl.CostEstimate(
        flops=3 * B * C * H * W,                 # mul + add + max compares
        transcendentals=0,
        bytes_accessed=B * C * H * W * (in_itemsize + out_itemsize),  # 1R+1W
    )

    return pl.pallas_call(
        _preprocess_kernel,
        out_shape=jax.ShapeDtypeStruct((B, C, H, W), out_dtype),
        grid=(B,),
        in_specs=[pl.BlockSpec((1, C, H, W), lambda b: (b, 0, 0, 0))],
        out_specs=pl.BlockSpec((1, C, H, W), lambda b: (b, 0, 0, 0)),
        compiler_params=pltpu.CompilerParams(
            # Batch axis shards across TensorCores (v7x megacore) when B >= 2.
            # TODO(synk): for B == 1 on v7x, add a parallel H-split grid axis
            # with a two-pass (per-channel max, then rescale) scheme so both
            # TensorCores share a single image.
            dimension_semantics=("parallel",),
            # 640x640 f32 image block ~4.7 MiB; in+out double-buffered
            # ~19 MiB.  32 MiB fits v5e/v6e/v7x (v7x physical VMEM = 64 MiB)
            # with headroom and overrides v5e's 16 MiB scoped default.
            vmem_limit_bytes=32 * 1024 * 1024,
        ),
        cost_estimate=cost,
        # NOTE: input_output_aliases={0: 0} would save a batch-sized HBM
        # allocation if the caller donates `batch`; left off so the input
        # stays live for the correctness check below.
    )(batch)


def post_model_forward(batch):
    """Pallas equivalent of PostModel.forward's tensor math."""
    normalized_batch = preprocess(batch)
    # TODO(synk): self.model(normalized_batch, conf=..., iou=...) is an
    # external YOLO11 network + NMS returning ultralytics Results; the Nx5
    # (xyxy, conf) concatenation that follows has no in-script Pallas
    # equivalent and is not synthesized here.
    return normalized_batch


def _reference(batch):
    # Pure-JAX reference mirroring the PyTorch code.
    std = jnp.array(_IMAGENET_STD, dtype=batch.dtype).reshape(1, 3, 1, 1)
    mean = jnp.array(_IMAGENET_MEAN, dtype=batch.dtype).reshape(1, 3, 1, 1)
    denorm = batch * std + mean
    mx = jnp.max(denorm, axis=(1, 2, 3), keepdims=True)
    return denorm / mx


if __name__ == "__main__":
    key = jax.random.PRNGKey(0)
    # RGB images, batch=2 (exercises the "parallel" batch grid), 16x16 spatial.
    x = jax.random.normal(key, (2, 3, 16, 16), dtype=jnp.float32)

    out = post_model_forward(x)
    out = jax.block_until_ready(out)

    ref = _reference(x)
    assert out.shape == ref.shape, (out.shape, ref.shape)
    assert jnp.allclose(out, ref, atol=1e-5, rtol=1e-5), "mismatch vs reference"

    print("KERNEL_OK")
</pallas_src>

<mosaic_0001>
module attributes {stable_mosaic.version = 11 : i64} {
  func.func @_preprocess_kernel(%arg0: i32, %arg1: memref<1x3x16x16xf32, #tpu.memory_space<vmem>>, %arg2: memref<1x3x16x16xf32, #tpu.memory_space<vmem>>) attributes {dimension_semantics = [#tpu.dimension_semantics<parallel>], iteration_bounds = array<i64: 2>, scalar_prefetch = 0 : i64, scratch_operands = 0 : i64, tpu.core_type = #tpu.core_type<tc>, window_params = [{transform_indices = @transform_0, window_bounds = array<i64: 1, 3, 16, 16>}, {transform_indices = @transform_1, window_bounds = array<i64: 1, 3, 16, 16>}]} {
    %c0 = arith.constant 0 : index
    %c0_0 = arith.constant 0 : index
    %c0_1 = arith.constant 0 : index
    %c0_2 = arith.constant 0 : index
    %0 = vector.load %arg1[%c0, %c0_0, %c0_1, %c0_2] : memref<1x3x16x16xf32, #tpu.memory_space<vmem>>, vector<1x1x16x16xf32>
    %1 = vector.shape_cast %0 : vector<1x1x16x16xf32> to vector<16x16xf32>
    %2 = vector.shape_cast %1 : vector<16x16xf32> to vector<1x16x16xf32>
    %cst = arith.constant dense<0xFF800000> : vector<1xf32>
    %3 = vector.multi_reduction <maximumf>, %2, %cst [1, 2] : vector<1x16x16xf32> to vector<1xf32>
    %4 = vector.shape_cast %3 : vector<1xf32> to vector<1x1x1xf32>
    %5 = vector.extract %4[0, 0, 0] : f32 from vector<1x1x1xf32>
    %cst_3 = arith.constant 2.290000e-01 : f32
    %6 = arith.mulf %5, %cst_3 : f32
    %cst_4 = arith.constant 4.850000e-01 : f32
    %7 = arith.addf %6, %cst_4 : f32
    %c0_5 = arith.constant 0 : index
    %c1 = arith.constant 1 : index
    %c0_6 = arith.constant 0 : index
    %c0_7 = arith.constant 0 : index
    %8 = vector.load %arg1[%c0_5, %c1, %c0_6, %c0_7] : memref<1x3x16x16xf32, #tpu.memory_space<vmem>>, vector<1x1x16x16xf32>
    %9 = vector.shape_cast %8 : vector<1x1x16x16xf32> to vector<16x16xf32>
    %10 = vector.shape_cast %9 : vector<16x16xf32> to vector<1x16x16xf32>
    %cst_8 = arith.constant dense<0xFF800000> : vector<1xf32>
    %11 = vector.multi_reduction <maximumf>, %10, %cst_8 [1, 2] : vector<1x16x16xf32> to vector<1xf32>
    %12 = vector.shape_cast %11 : vector<1xf32> to vector<1x1x1xf32>
    %13 = vector.extract %12[0, 0, 0] : f32 from vector<1x1x1xf32>
    %cst_9 = arith.constant 2.240000e-01 : f32
    %14 = arith.mulf %13, %cst_9 : f32
    %cst_10 = arith.constant 4.560000e-01 : f32
    %15 = arith.addf %14, %cst_10 : f32
    %c0_11 = arith.constant 0 : index
    %c2 = arith.constant 2 : index
    %c0_12 = arith.constant 0 : index
    %c0_13 = arith.constant 0 : index
    %16 = vector.load %arg1[%c0_11, %c2, %c0_12, %c0_13] : memref<1x3x16x16xf32, #tpu.memory_space<vmem>>, vector<1x1x16x16xf32>
    %17 = vector.shape_cast %16 : vector<1x1x16x16xf32> to vector<16x16xf32>
    %18 = vector.shape_cast %17 : vector<16x16xf32> to vector<1x16x16xf32>
    %cst_14 = arith.constant dense<0xFF800000> : vector<1xf32>
    %19 = vector.multi_reduction <maximumf>, %18, %cst_14 [1, 2] : vector<1x16x16xf32> to vector<1xf32>
    %20 = vector.shape_cast %19 : vector<1xf32> to vector<1x1x1xf32>
    %21 = vector.extract %20[0, 0, 0] : f32 from vector<1x1x1xf32>
    %cst_15 = arith.constant 2.250000e-01 : f32
    %22 = arith.mulf %21, %cst_15 : f32
    %cst_16 = arith.constant 4.060000e-01 : f32
    %23 = arith.addf %22, %cst_16 : f32
    %24 = arith.maximumf %7, %15 : f32
    %25 = arith.maximumf %24, %23 : f32
    %cst_17 = arith.constant 1.000000e+00 : f32
    %26 = arith.divf %cst_17, %25 : f32
    %cst_18 = arith.constant 2.290000e-01 : f32
    %27 = arith.mulf %cst_18, %26 : f32
    %cst_19 = arith.constant 4.850000e-01 : f32
    %28 = arith.mulf %cst_19, %26 : f32
    %c0_20 = arith.constant 0 : index
    %c0_21 = arith.constant 0 : index
    %c0_22 = arith.constant 0 : index
    %c0_23 = arith.constant 0 : index
    %29 = vector.load %arg1[%c0_20, %c0_21, %c0_22, %c0_23] : memref<1x3x16x16xf32, #tpu.memory_space<vmem>>, vector<1x1x16x16xf32>
    %30 = vector.shape_cast %29 : vector<1x1x16x16xf32> to vector<16x16xf32>
    %31 = vector.broadcast %27 : f32 to vector<16x16xf32>
    %32 = arith.mulf %30, %31 : vector<16x16xf32>
    %33 = vector.broadcast %28 : f32 to vector<16x16xf32>
    %34 = arith.addf %32, %33 : vector<16x16xf32>
    %c0_24 = arith.constant 0 : index
    %c0_25 = arith.constant 0 : index
    %c0_26 = arith.constant 0 : index
    %c0_27 = arith.constant 0 : index
    %35 = vector.load %arg2[%c0_24, %c0_25, %c0_26, %c0_27] : memref<1x3x16x16xf32, #tpu.memory_space<vmem>>, vector<1x1x16x16xf32>
    %36 = vector.shape_cast %35 : vector<1x1x16x16xf32> to vector<16x16xf32>
    %37 = vector.shape_cast %34 : vector<16x16xf32> to vector<1x1x16x16xf32>
    tpu.vector_store %arg2[%c0_24, %c0_25, %c0_26, %c0_27], %37 {strides = array<i32>} : memref<1x3x16x16xf32, #tpu.memory_space<vmem>>, vector<1x1x16x16xf32>,
    %cst_28 = arith.constant 2.240000e-01 : f32
    %38 = arith.mulf %cst_28, %26 : f32
    %cst_29 = arith.constant 4.560000e-01 : f32
    %39 = arith.mulf %cst_29, %26 : f32
    %c0_30 = arith.constant 0 : index
    %c1_31 = arith.constant 1 : index
    %c0_32 = arith.constant 0 : index
    %c0_33 = arith.constant 0 : index
    %40 = vector.load %arg1[%c0_30, %c1_31, %c0_32, %c0_33] : memref<1x3x16x16xf32, #tpu.memory_space<vmem>>, vector<1x1x16x16xf32>
    %41 = vector.shape_cast %40 : vector<1x1x16x16xf32> to vector<16x16xf32>
    %42 = vector.broadcast %38 : f32 to vector<16x16xf32>
    %43 = arith.mulf %41, %42 : vector<16x16xf32>
    %44 = vector.broadcast %39 : f32 to vector<16x16xf32>
    %45 = arith.addf %43, %44 : vector<16x16xf32>
    %c0_34 = arith.constant 0 : index
    %c1_35 = arith.constant 1 : index
    %c0_36 = arith.constant 0 : index
    %c0_37 = arith.constant 0 : index
    %46 = vector.load %arg2[%c0_34, %c1_35, %c0_36, %c0_37] : memref<1x3x16x16xf32, #tpu.memory_space<vmem>>, vector<1x1x16x16xf32>
    %47 = vector.shape_cast %46 : vector<1x1x16x16xf32> to vector<16x16xf32>
    %48 = vector.shape_cast %45 : vector<16x16xf32> to vector<1x1x16x16xf32>
    tpu.vector_store %arg2[%c0_34, %c1_35, %c0_36, %c0_37], %48 {strides = array<i32>} : memref<1x3x16x16xf32, #tpu.memory_space<vmem>>, vector<1x1x16x16xf32>,
    %cst_38 = arith.constant 2.250000e-01 : f32
    %49 = arith.mulf %cst_38, %26 : f32
    %cst_39 = arith.constant 4.060000e-01 : f32
    %50 = arith.mulf %cst_39, %26 : f32
    %c0_40 = arith.constant 0 : index
    %c2_41 = arith.constant 2 : index
    %c0_42 = arith.constant 0 : index
    %c0_43 = arith.constant 0 : index
    %51 = vector.load %arg1[%c0_40, %c2_41, %c0_42, %c0_43] : memref<1x3x16x16xf32, #tpu.memory_space<vmem>>, vector<1x1x16x16xf32>
    %52 = vector.shape_cast %51 : vector<1x1x16x16xf32> to vector<16x16xf32>
    %53 = vector.broadcast %49 : f32 to vector<16x16xf32>
    %54 = arith.mulf %52, %53 : vector<16x16xf32>
    %55 = vector.broadcast %50 : f32 to vector<16x16xf32>
    %56 = arith.addf %54, %55 : vector<16x16xf32>
    %c0_44 = arith.constant 0 : index
    %c2_45 = arith.constant 2 : index
    %c0_46 = arith.constant 0 : index
    %c0_47 = arith.constant 0 : index
    %57 = vector.load %arg2[%c0_44, %c2_45, %c0_46, %c0_47] : memref<1x3x16x16xf32, #tpu.memory_space<vmem>>, vector<1x1x16x16xf32>
    %58 = vector.shape_cast %57 : vector<1x1x16x16xf32> to vector<16x16xf32>
    %59 = vector.shape_cast %56 : vector<16x16xf32> to vector<1x1x16x16xf32>
    tpu.vector_store %arg2[%c0_44, %c2_45, %c0_46, %c0_47], %59 {strides = array<i32>} : memref<1x3x16x16xf32, #tpu.memory_space<vmem>>, vector<1x1x16x16xf32>,
    return
  }
  func.func @transform_0(%arg0: i32) -> (i32, i32, i32, i32) {
    %c0_i32 = arith.constant 0 : i32
    %c0_i32_0 = arith.constant 0 : i32
    %c0_i32_1 = arith.constant 0 : i32
    %c0_i32_2 = arith.constant 0 : i32
    return %arg0, %c0_i32, %c0_i32_0, %c0_i32_1 : i32, i32, i32, i32
  }
  func.func @transform_1(%arg0: i32) -> (i32, i32, i32, i32) {
    %c0_i32 = arith.constant 0 : i32
    %c0_i32_0 = arith.constant 0 : i32
    %c0_i32_1 = arith.constant 0 : i32
    %c0_i32_2 = arith.constant 0 : i32
    return %arg0, %c0_i32, %c0_i32_0, %c0_i32_1 : i32, i32, i32, i32
  }
}

</mosaic_0001>

<llo_original>
// kernel: tpu_custom_call.1
$region0: #{tpu_custom_call.1}
  #allocation0 [shape = 'u32[]', space=smem, size = 0x4, offset = 0x4, fixed_abs, tag = 'smem constant byte address 0x4 - core index']
  #allocation1 [shape = 'u32[144,128]{1,0:T(1,128)}', space=vmem, size = 0x12000, scoped, tag = 'internal scratch']
  %s0 = inlined_call_operand.hbm [shape: f32[2,3,16,16], index: 0, kind: input, shape index: {}]
  %s1 = inlined_call_operand.hbm [shape: f32[2,3,16,16], index: 1, kind: output, shape index: {}]
  %s2 = sld [smem:[#allocation0]]
  $region41: #{tpu_custom_call.1} parent=0
    _
  %s4 = ssub.s32 1, %s2
  %s5 = scalar_select 0, %s4, %s2
  $region1: #{tpu_custom_call.1} parent=0
    #allocation2 [shape = 'u8[49152]{0}', space=vmem, size = 0xc000, scoped, tag = 'input window, operand 0']
    #allocation3 [shape = 's32[2]{0}', space=sflag, size = 0x8, scoped, tag = 'scoped memory for tpu_custom_call.1']
    #allocation4 [shape = 's32[2]{0}', space=sflag, size = 0x8, scoped, tag = 'scoped memory for tpu_custom_call.1']
    #allocation5 [shape = 'u8[49152]{0}', space=vmem, size = 0xc000, scoped, tag = 'output window, operand 0']
    %6 = vsyncpa [#allocation3], 0
    %s7 = scalar_lea.sflag [#allocation3], 1
    %8 = vsyncpa %s7, 0
    %9 = vsyncpa [#allocation4], 0
    %s10 = scalar_lea.sflag [#allocation4], 1
    %11 = vsyncpa %s10, 0
    loop: start=0, step=1, limit=4
    $region2: #{tpu_custom_call.1} parent=1 // loop_pre_header
      _
    $region3: #{tpu_custom_call.1} parent=1 // loop_header
      %s13 = sphi 0, %s17
      %p14 = scmp.ge.s32.totalorder %s13, 4
      %s23 = sphi 0, %s25
      %s26 = sphi 0, %s23
      %s27 = sphi 0, %s26
      %s43 = sphi 0, %s27
      %s49 = sphi 0, %s51
      %s52 = sphi 0, %s49
      %s53 = sphi 0, %s52
      %s69 = sphi 0, %s53
    $region4: #{tpu_custom_call.1} parent=1 // loop_header_branch
      %16 = sbr.rel (%p14) target = $region8
    $region5: #{tpu_custom_call.1} parent=1 // loop_body
      %s18 = ssub.s32 %s13, 1
      %s19 = ssub.s32 %s13, 2
      %s20 = sadd.s32 %s13, 1
      %s21 = ssub.s32 %s13, %s20
      %p22 = scmp.eq.s32.totalorder %s21, 0
      %s24 = sadd.s32 %s23, 1
      %s25 = scalar_select %p22, %s23, %s24
      %p28 = pneg %p22
      %p29 = scmp.eq.s32.totalorder %s13, 1
      %p30 = por %p28, %p29
      %p31 = scmp.ne.s32.totalorder %s23, %s26
      %p32 = scmp.eq.s32.totalorder %s13, 0
      %p33 = por %p31, %p32
      %p34 = scmp.ne.s32.totalorder %s23, %s26
      %p35 = scmp.eq.s32.totalorder %s18, 1
      %p36 = por %p34, %p35
      %p37 = scmp.ne.s32.totalorder %s26, %s27
      %p38 = scmp.eq.s32.totalorder %s18, 0
      %p39 = por %p37, %p38
      %p40 = scmp.ne.s32.totalorder %s26, %s27
      %p41 = scmp.eq.s32.totalorder %s19, 1
      %p42 = por %p40, %p41
      %p44 = scmp.ne.s32.totalorder %s27, %s43
      %p45 = scmp.eq.s32.totalorder %s19, 0
      %p46 = por %p44, %p45
      %s47 = ssub.s32 %s13, %s20
      %p48 = scmp.eq.s32.totalorder %s47, 0
      %s50 = sadd.s32 %s49, 1
      %s51 = scalar_select %p48, %s49, %s50
      %p54 = pneg %p48
      %p55 = scmp.eq.s32.totalorder %s13, 1
      %p56 = por %p54, %p55
      %p57 = scmp.ne.s32.totalorder %s49, %s52
      %p58 = scmp.eq.s32.totalorder %s13, 0
      %p59 = por %p57, %p58
      %p60 = scmp.ne.s32.totalorder %s49, %s52
      %p61 = scmp.eq.s32.totalorder %s18, 1
      %p62 = por %p60, %p61
      %p63 = scmp.ne.s32.totalorder %s52, %s53
      %p64 = scmp.eq.s32.totalorder %s18, 0
      %p65 = por %p63, %p64
      %p66 = scmp.ne.s32.totalorder %s52, %s53
      %p67 = scmp.eq.s32.totalorder %s19, 1
      %p68 = por %p66, %p67
      %p70 = scmp.ne.s32.totalorder %s53, %s69
      %p71 = scmp.eq.s32.totalorder %s19, 0
      %p72 = por %p70, %p71
      %p73 = scmp.le.s32.totalorder 1, %s13
      %p74 = scmp.lt.s32.totalorder %s13, 3
      %p75 = pnand %p73, %p74
      %p76 = pneg %p75
      // Predicated region
      $region9: #{tpu_custom_call.1} parent=5 // pred_check
        _
      $region10: #{tpu_custom_call.1} parent=5 // pred_check_branch
        %78 = sbr.rel (%p75) target = $region12
      $region11: #{tpu_custom_call.1} parent=5 // pred_region
        %s79 = ssub.s32 %s13, 1
      $region12: #{tpu_custom_call.1} parent=5 // pred_fallthru
        _
      %p80 = scmp.lt.s32.totalorder %s13, 2
      // Predicated region
      $region13: #{tpu_custom_call.1} parent=5 // pred_check
        %p81 = pneg %p80
      $region14: #{tpu_custom_call.1} parent=5 // pred_check_branch
        %83 = sbr.rel (%p81) target = $region16
      $region15: #{tpu_custom_call.1} parent=5 // pred_region
        // Predicated region
        $region17: #{tpu_custom_call.1} parent=15 // pred_check
          %p84 = pneg %p33
        $region18: #{tpu_custom_call.1} parent=15 // pred_check_branch
          %86 = sbr.rel (%p84) target = $region20
        $region19: #{tpu_custom_call.1} parent=15 // pred_region
          %s87 = sand.u32 %s23, 1
          %s88 = scalar_lea.sflag [#allocation3], %s87
          %s89 = sand.u32 %s23, 1
          %s90 = smul.addr %s89, 48
          %s91 = scalar_lea.vmem [#allocation2], %s90
          %s93 = ssub.s32 768, 768
          %94 = vsyncadd %s88, %s93
          %s95 = smul.addr %s13, 6
          %s96 = smul.addr %s95, 128
          %s97 = scalar_lea.hbm %s0, %s96
          %s98 = sshll.u32 %s91, 4
          %s99 = int_to_ptr.vmem [resolvable:$true] %s98
          %104 = dma.hbm_to_vmem [thread:$0]  %s97, 768, %s99, %s88, 128, 128, 8
        $region20: #{tpu_custom_call.1} parent=15 // pred_fallthru
          _
      $region16: #{tpu_custom_call.1} parent=5 // pred_fallthru
        _
      %p105 = scmp.le.s32.totalorder 1, %s13
      %p106 = scmp.lt.s32.totalorder %s13, 3
      %p107 = pnand %p105, %p106
      %p108 = pneg %p107
      // Predicated region
      $region21: #{tpu_custom_call.1} parent=5 // pred_check
        _
      $region22: #{tpu_custom_call.1} parent=5 // pred_check_branch
        %110 = sbr.rel (%p107) target = $region24
      $region23: #{tpu_custom_call.1} parent=5 // pred_region
        %s111 = ssub.s32 %s13, 1
        %s112 = sand.u32 %s26, 1
        %s113 = scalar_lea.sflag [#allocation3], %s112
        %s114 = sand.u32 %s26, 1
        %s115 = smul.addr %s114, 48
        %s116 = scalar_lea.vmem [#allocation2], %s115
        // Predicated region
        $region25: #{tpu_custom_call.1} parent=23 // pred_check
          %p117 = pneg %p39
        $region26: #{tpu_custom_call.1} parent=23 // pred_check_branch
          %119 = sbr.rel (%p117) target = $region28
        $region27: #{tpu_custom_call.1} parent=23 // pred_region
          %120 = dma.done %s113, 768
        $region28: #{tpu_custom_call.1} parent=23 // pred_fallthru
          _
        %s121 = sand.u32 %s26, 1
        %s122 = scalar_lea.sflag [#allocation3], %s121
        %s123 = sand.u32 %s26, 1
        %s124 = smul.addr %s123, 48
        %s125 = scalar_lea.vmem [#allocation2], %s124
        %p126 = pneg %p39
        %p127 = pneg %p36
        %p128 = pneg %p65
        %p129 = pneg %p62
        %s130 = sand.u32 %s52, 1
        %s131 = scalar_lea.sflag [#allocation4], %s130
        %s132 = sand.u32 %s52, 1
        %s133 = smul.addr %s132, 48
        %s134 = scalar_lea.vmem [#allocation5], %s133
        %v135 = vld [vmem:[%s116] sm:$0xff]
        %v136 = vld [vmem:[%s116 + $0x8] sm:$0xff]
        %vm137 = vcmask 130048
        %v138 = vsel %vm137, %v135, -inf
        %v139 = vsel %vm137, %v136, -inf
        %v140 = vmax.f32 %v138, %v139
        %141 = vmax.xlane.f32.xlu0 %v140
        %v142 = vpop.xlane.xlu0 %141
        %v143 = vrot.slane %v142, 4
        %v144 = vmax.f32 %v142, %v143
        %v145 = vrot.slane %v144, 2
        %v146 = vmax.f32 %v144, %v145
        %v147 = vrot.slane %v146, 1
        %v148 = vmax.f32 %v146, %v147
        %s149 = vtos %v148
        %s150 = smul.f32 %s149, 0.229
        %s151 = sadd.f32 %s150, 0.485
        %s152 = scalar_lea.vmem %s116, 16 [#allocation2]
        %v153 = vld [vmem:[%s152] sm:$0xff]
        %v154 = vld [vmem:[%s152 + $0x8] sm:$0xff]
        %v155 = vsel %vm137, %v153, -inf
        %v156 = vsel %vm137, %v154, -inf
        %v157 = vmax.f32 %v155, %v156
        %158 = vmax.xlane.f32.xlu0 %v157
        %v159 = vpop.xlane.xlu0 %158
        %v160 = vrot.slane %v159, 4
        %v161 = vmax.f32 %v159, %v160
        %v162 = vrot.slane %v161, 2
        %v163 = vmax.f32 %v161, %v162
        %v164 = vrot.slane %v163, 1
        %v165 = vmax.f32 %v163, %v164
        %s166 = vtos %v165
        %s167 = smul.f32 %s166, 0.224
        %s168 = sadd.f32 %s167, 0.456
        %s169 = scalar_lea.vmem %s116, 32 [#allocation2]
        %v170 = vld [vmem:[%s169] sm:$0xff]
        %v171 = vld [vmem:[%s169 + $0x8] sm:$0xff]
        %v172 = vsel %vm137, %v170, -inf
        %v173 = vsel %vm137, %v171, -inf
        %v174 = vmax.f32 %v172, %v173
        %175 = vmax.xlane.f32.xlu0 %v174
        %v176 = vpop.xlane.xlu0 %175
        %v177 = vrot.slane %v176, 4
        %v178 = vmax.f32 %v176, %v177
        %v179 = vrot.slane %v178, 2
        %v180 = vmax.f32 %v178, %v179
        %v181 = vrot.slane %v180, 1
        %v182 = vmax.f32 %v180, %v181
        %s183 = vtos %v182
        %s184 = smul.f32 %s183, 0.225
        %s185 = sadd.f32 %s184, 0.406
        %s186 = smax.f32 %s151, %s168
        %s187 = smax.f32 %s186, %s185
        %v188 = vstv %s187
        %v189 = vrcp.pop %v188
        %s190 = vtos %v189
        %s191 = smul.f32 %s190, 0.229
        %s192 = smul.f32 %s190, 0.485
        %v193 = vstv %s191
        %v194 = vmul.f32 %v135, %v193
        %v195 = vmul.f32 %v136, %v193
        %v196 = vstv %s192
        %v197 = vadd.f32 %v194, %v196
        %v198 = vadd.f32 %v195, %v196
        %199 = vst.msk [vmem:[%s134] sm:$0xff] %vm137, %v197
        %200 = vst.msk [vmem:[%s134 + $0x8] sm:$0xff] %vm137, %v198
        %s201 = smul.f32 %s190, 0.224
        %s202 = smul.f32 %s190, 0.456
        %v203 = vld [vmem:[%s152] sm:$0xff]
        %v204 = vld [vmem:[%s152 + $0x8] sm:$0xff]
        %v205 = vstv %s201
        %v206 = vmul.f32 %v203, %v205
        %v207 = vmul.f32 %v204, %v205
        %v208 = vstv %s202
        %v209 = vadd.f32 %v206, %v208
        %v210 = vadd.f32 %v207, %v208
        %s211 = scalar_lea.vmem %s134, 16 [#allocation5]
        %212 = vst.msk [vmem:[%s211] sm:$0xff] %vm137, %v209
        %213 = vst.msk [vmem:[%s211 + $0x8] sm:$0xff] %vm137, %v210
        %s214 = smul.f32 %s190, 0.225
        %s215 = smul.f32 %s190, 0.406
        %v216 = vld [vmem:[%s169] sm:$0xff]
        %v217 = vld [vmem:[%s169 + $0x8] sm:$0xff]
        %v218 = vstv %s214
        %v219 = vmul.f32 %v216, %v218
        %v220 = vmul.f32 %v217, %v218
        %v221 = vstv %s215
        %v222 = vadd.f32 %v219, %v221
        %v223 = vadd.f32 %v220, %v221
        %s224 = scalar_lea.vmem %s134, 32 [#allocation5]
        %225 = vst.msk [vmem:[%s224] sm:$0xff] %vm137, %v222
        %226 = vst.msk [vmem:[%s224 + $0x8] sm:$0xff] %vm137, %v223
        %s227 = sand.u32 %s52, 1
        %s228 = scalar_lea.sflag [#allocation4], %s227
        %s229 = sand.u32 %s52, 1
        %s230 = smul.addr %s229, 48
        %s231 = scalar_lea.vmem [#allocation5], %s230
        // Predicated region
        $region29: #{tpu_custom_call.1} parent=23 // pred_check
          %p232 = pneg %p62
        $region30: #{tpu_custom_call.1} parent=23 // pred_check_branch
          %234 = sbr.rel (%p232) target = $region32
        $region31: #{tpu_custom_call.1} parent=23 // pred_region
          %s236 = ssub.s32 768, 768
          %237 = vsyncadd %s228, %s236
          %s238 = smul.addr %s18, 6
          %s239 = smul.addr %s238, 128
          %s240 = scalar_lea.hbm %s1, %s239
          %s241 = sshll.u32 %s231, 4
          %s242 = int_to_ptr.vmem [resolvable:$true] %s241
          %247 = dma.vmem_to_hbm [thread:$0]  %s242, 768, %s240, %s228, 128, 128, 8
        $region32: #{tpu_custom_call.1} parent=23 // pred_fallthru
          _
      $region24: #{tpu_custom_call.1} parent=5 // pred_fallthru
        _
      %p248 = scmp.le.s32.totalorder 2, %s13
      // Predicated region
      $region33: #{tpu_custom_call.1} parent=5 // pred_check
        %p249 = pneg %p248
      $region34: #{tpu_custom_call.1} parent=5 // pred_check_branch
        %251 = sbr.rel (%p249) target = $region36
      $region35: #{tpu_custom_call.1} parent=5 // pred_region
        %s252 = ssub.s32 %s13, 2
        // Predicated region
        $region37: #{tpu_custom_call.1} parent=35 // pred_check
          %p253 = pneg %p68
        $region38: #{tpu_custom_call.1} parent=35 // pred_check_branch
          %255 = sbr.rel (%p253) target = $region40
        $region39: #{tpu_custom_call.1} parent=35 // pred_region
          %s256 = sand.u32 %s53, 1
          %s257 = scalar_lea.sflag [#allocation4], %s256
          %s258 = sand.u32 %s53, 1
          %s259 = smul.addr %s258, 48
          %s260 = scalar_lea.vmem [#allocation5], %s259
          %261 = dma.done %s257, 768
        $region40: #{tpu_custom_call.1} parent=35 // pred_fallthru
          _
      $region36: #{tpu_custom_call.1} parent=5 // pred_fallthru
        _
    $region6: #{tpu_custom_call.1} parent=1 // loop_footer
      %s17 = sadd.s32 1, %s13
    $region7: #{tpu_custom_call.1} parent=1 // loop_footer_branch
      %12 = sbr.rel target = $region3
    $region8: #{tpu_custom_call.1} parent=1 // loop_exit
      _
    %262 = vsyncpa [#allocation3], 1
    %s263 = scalar_lea.sflag [#allocation3], 1
    %264 = vsyncpa %s263, 1
    %265 = vsyncpa [#allocation4], 1
    %s266 = scalar_lea.sflag [#allocation4], 1
    %267 = vsyncpa %s266, 1

</llo_original>
